<compile_context>
chip_gen: v5e
topology: v5e:2x2
jax: 0.10.0
libtpu: 0.0.40
codegen_flags: <defaults>
</compile_context>

<pallas_src>
import functools

import jax
import jax.numpy as jnp
from jax.experimental import pallas as pl
from jax.experimental.pallas import tpu as pltpu

EPS = 1e-12
_LANE = 128
_VMEM_BLOCK_BUDGET = 20 * 1024 * 1024   # in+out blocks, double-buffered
_VMEM_LIMIT_BYTES = 32 * 1024 * 1024


def _round_up(x, m):
    return ((x + m - 1) // m) * m


def _step_bytes(bb, c, tt, itemsize):
    # input block + output block, each double-buffered by the pipeline.
    return 2 * 2 * bb * c * tt * itemsize


def _cln_kernel(x_ref, gamma_ref, beta_ref, inv_num_ref, o_ref,
                csum_ref, csq_ref, *, eps):
    # x block: (Bb, C, Tt); gamma/beta: (1, C, 1); inv_num: (1, Tt) f32;
    # carries: (Bb, 1, 1) f32 VMEM scratch (persist across time tiles).
    t = pl.program_id(1)

    # New batch block -> reset the running cumulative sums.
    @pl.when(t == 0)
    def _():
        csum_ref[...] = jnp.zeros_like(csum_ref)
        csq_ref[...] = jnp.zeros_like(csq_ref)

    Bb = x_ref.shape[0]
    Tt = x_ref.shape[2]

    gamma = gamma_ref[0].astype(jnp.float32)      # (C, 1)
    beta = beta_ref[0].astype(jnp.float32)        # (C, 1)
    inv_num = inv_num_ref[...]                    # (1, Tt): 1/(C*(t_global+1))

    # Lane index for the segmented scan over the [sum | sq] lane-concat.
    col = jax.lax.broadcasted_iota(jnp.int32, (1, 2 * Tt), 1)
    local_col = jnp.where(col >= Tt, col - Tt, col)

    def row_body(i, carry):
        x = x_ref[i].astype(jnp.float32)          # (C, Tt)

        # Per-time-step statistics over the channel (sublane) axis.
        step_sum = jnp.sum(x, axis=0, keepdims=True)        # (1, Tt)
        step_sq = jnp.sum(x * x, axis=0, keepdims=True)     # (1, Tt)

        # One fused inclusive prefix sum (Hillis-Steele) over both statistics.
        # Lane concat at offset Tt (multiple of 128) is aligned.  Rolls wrap
        # circularly; wrapped lanes are masked out via local_col >= shift, so
        # each Tt-wide segment is scanned independently.
        v = jnp.concatenate([step_sum, step_sq], axis=1)     # (1, 2*Tt)
        shift = 1
        while shift < Tt:
            rolled = pltpu.roll(v, shift, axis=1)            # rolled[:, t] = v[:, t-shift]
            v = jnp.where(local_col >= shift, v + rolled, v)
            shift *= 2

        cum_sum = v[:, :Tt] + csum_ref[i]                    # (1, Tt)
        cum_sq = v[:, Tt:] + csq_ref[i]

        # New carry = last lane of the inclusive cumulative sums (already
        # includes the previous carry).  Note: plain f32 carries, same as the
        # reference's f32 cumsum.
        csum_ref[i] = cum_sum[:, Tt - 1:Tt]
        csq_ref[i] = cum_sq[:, Tt - 1:Tt]

        cum_mean = cum_sum * inv_num
        # Clamp: E[x^2] - E[x]^2 can go slightly negative in f32 (cancellation).
        cum_var = jnp.maximum(cum_sq * inv_num - cum_mean * cum_mean, 0.0)

        denom = jnp.sqrt(cum_var) + eps
        inv_std = pl.reciprocal(denom, approx=True)          # EUP vrcp
        inv_std = inv_std * (2.0 - denom * inv_std)          # Newton -> ~f32 exact

        out = (x - cum_mean) * inv_std * gamma + beta
        o_ref[i] = out.astype(o_ref.dtype)
        return carry

    if Bb == 1:
        row_body(0, 0)
    else:
        jax.lax.fori_loop(0, Bb, row_body, 0)


def cumulative_layer_norm_1d(x, gamma, beta, eps=EPS, time_tile=2048,
                             max_batch_block=8):
    """x: (B, C, T) or (B, C, S, chunk). gamma/beta: broadcastable to (1, C, 1).

    time_tile: target lane width per grid step (rounded to a multiple of 128
    and clamped by a VMEM block budget).  Large tiles are good on all TPU
    generations (v5e included); the scoped-VMEM limit is raised in
    compiler_params instead of shrinking the tile.
    """
    n_dims = x.ndim
    if n_dims == 4:
        B, C, S, chunk = x.shape
        T = S * chunk
        x3 = x.reshape(B, C, T)
    elif n_dims == 3:
        B, C, T = x.shape
        x3 = x
    else:
        raise ValueError(f"Only 3D or 4D input supported, got {n_dims}D")

    itemsize = jnp.dtype(x3.dtype).itemsize

    # Lane-aligned time tile, as large as the VMEM block budget allows.
    Tt = min(_round_up(time_tile, _LANE), _round_up(T, _LANE))
    while Tt > _LANE and _step_bytes(1, C, Tt, itemsize) > _VMEM_BLOCK_BUDGET:
        Tt = _round_up(Tt // 2, _LANE)

    # Pad T up to a multiple of the tile (zero padding sits after the valid
    # data, so it never affects valid cumulative statistics; padded outputs
    # are sliced off below).
    T_pad = _round_up(T, Tt)
    if T_pad != T:
        x3 = jnp.pad(x3, ((0, 0), (0, 0), (0, T_pad - T)))
    nT = T_pad // Tt

    # Batch block: largest divisor of B (<= max_batch_block) that fits the
    # VMEM budget and keeps >= 2 parallel blocks when B >= 2 (v7x megacore).
    Bb = 1
    for d in range(1, min(B, max_batch_block) + 1):
        if B % d:
            continue
        if B >= 2 and (B // d) < 2:
            continue
        if _step_bytes(d, C, Tt, itemsize) > _VMEM_BLOCK_BUDGET:
            continue
        Bb = d
    nB = B // Bb

    gamma = jnp.asarray(gamma, jnp.float32).reshape(1, C, 1)
    beta = jnp.asarray(beta, jnp.float32).reshape(1, C, 1)

    # Precompute 1 / (C * (t+1)) once (removes the in-kernel iota + divide).
    inv_num = 1.0 / (float(C) * jnp.arange(1, T_pad + 1, dtype=jnp.float32))
    inv_num = inv_num.reshape(1, T_pad)

    kernel = functools.partial(_cln_kernel, eps=float(eps))

    out = pl.pallas_call(
        kernel,
        out_shape=jax.ShapeDtypeStruct((B, C, T_pad), x3.dtype),
        grid_spec=pltpu.PrefetchScalarGridSpec(
            num_scalar_prefetch=0,
            grid=(nB, nT),
            in_specs=[
                pl.BlockSpec((Bb, C, Tt), lambda b, t: (b, 0, t)),
                pl.BlockSpec((1, C, 1), lambda b, t: (0, 0, 0)),
                pl.BlockSpec((1, C, 1), lambda b, t: (0, 0, 0)),
                pl.BlockSpec((1, Tt), lambda b, t: (0, t)),
            ],
            out_specs=pl.BlockSpec((Bb, C, Tt), lambda b, t: (b, 0, t)),
            scratch_shapes=[
                pltpu.VMEM((Bb, 1, 1), jnp.float32),   # running cum_sum carry
                pltpu.VMEM((Bb, 1, 1), jnp.float32),   # running cum_sq carry
            ],
        ),
        compiler_params=pltpu.CompilerParams(
            dimension_semantics=("parallel", "arbitrary"),
            vmem_limit_bytes=_VMEM_LIMIT_BYTES,
        ),
    )(x3, gamma, beta, inv_num)

    if T_pad != T:
        out = out[:, :, :T]
    if n_dims == 4:
        out = out.reshape(B, C, S, chunk)
    return out


def _reference(x, gamma, beta, eps=EPS):
    """Pure-JAX reference mirroring the PyTorch forward."""
    n_dims = x.ndim
    if n_dims == 4:
        B, C, S, chunk = x.shape
        x3 = x.reshape(B, C, S * chunk)
    else:
        x3 = x
    B, C, T = x3.shape
    step_sum = jnp.sum(x3, axis=1)
    step_sq = jnp.sum(x3 * x3, axis=1)
    cum_sum = jnp.cumsum(step_sum, axis=1)
    cum_sq = jnp.cumsum(step_sq, axis=1)
    cum_num = jnp.arange(C, C * (T + 1), C, dtype=jnp.float32)
    cum_mean = cum_sum / cum_num
    cum_sq_mean = cum_sq / cum_num
    cum_var = cum_sq_mean - cum_mean ** 2
    cum_mean = cum_mean[:, None, :]
    cum_var = cum_var[:, None, :]
    out = (x3 - cum_mean) / (jnp.sqrt(cum_var) + eps) * gamma + beta
    if n_dims == 4:
        out = out.reshape(B, C, S, chunk)
    return out


if __name__ == "__main__":
    key = jax.random.PRNGKey(0)
    k1, k2, k3 = jax.random.split(key, 3)

    B, C, S, chunk = 2, 4, 16, 16          # T = S * chunk = 256
    x4 = jax.random.normal(k1, (B, C, S, chunk), dtype=jnp.float32)

    # Deterministic, non-trivial affine parameters (module inits to 1 / 0).
    gamma = (1.0 + 0.1 * jnp.arange(C, dtype=jnp.float32)).reshape(1, C, 1)
    beta = (0.05 * jnp.arange(C, dtype=jnp.float32) - 0.1).reshape(1, C, 1)

    # 4D input with a small time tile -> two time tiles, exercises the
    # cross-tile carry path.
    out4 = cumulative_layer_norm_1d(x4, gamma, beta, time_tile=128)
    out4 = jax.block_until_ready(out4)
    ref4 = _reference(x4, gamma, beta)
    assert out4.shape == x4.shape
    assert jnp.allclose(out4, ref4, atol=2e-4, rtol=2e-4)

    # 3D input with T not a multiple of 128 -> exercises the padding path.
    x3 = jax.random.normal(k2, (B, C, 200), dtype=jnp.float32)
    out3 = jax.block_until_ready(cumulative_layer_norm_1d(x3, gamma, beta))
    ref3 = _reference(x3, gamma, beta)
    assert out3.shape == x3.shape
    assert jnp.allclose(out3, ref3, atol=2e-4, rtol=2e-4)

    # 3D input with B=4, C=6 -> exercises batch-blocked grid steps (Bb=2)
    # together with multi-tile carries.
    Cb = 6
    gamma_b = (1.0 + 0.1 * jnp.arange(Cb, dtype=jnp.float32)).reshape(1, Cb, 1)
    beta_b = (0.05 * jnp.arange(Cb, dtype=jnp.float32) - 0.1).reshape(1, Cb, 1)
    xb = jax.random.normal(k3, (4, Cb, 384), dtype=jnp.float32)
    outb = jax.block_until_ready(
        cumulative_layer_norm_1d(xb, gamma_b, beta_b, time_tile=128))
    refb = _reference(xb, gamma_b, beta_b)
    assert outb.shape == xb.shape
    assert jnp.allclose(outb, refb, atol=2e-4, rtol=2e-4)

    print("KERNEL_OK")
</pallas_src>

<mosaic_0001>
module attributes {stable_mosaic.version = 11 : i64} {
  func.func @_cln_kernel(%arg0: i32, %arg1: i32, %arg2: memref<1x4x128xf32, #tpu.memory_space<vmem>>, %arg3: memref<1x4x1xf32, #tpu.memory_space<vmem>>, %arg4: memref<1x4x1xf32, #tpu.memory_space<vmem>>, %arg5: memref<1x128xf32, #tpu.memory_space<vmem>>, %arg6: memref<1x4x128xf32, #tpu.memory_space<vmem>>, %arg7: memref<1x1x1xf32, #tpu.memory_space<vmem>>, %arg8: memref<1x1x1xf32, #tpu.memory_space<vmem>>) attributes {dimension_semantics = [#tpu.dimension_semantics<parallel>, #tpu.dimension_semantics<arbitrary>], iteration_bounds = array<i64: 2, 2>, scalar_prefetch = 0 : i64, scratch_operands = 2 : i64, tpu.core_type = #tpu.core_type<tc>, window_params = [{transform_indices = @transform_0, window_bounds = array<i64: 1, 4, 128>}, {pipeline_mode = #tpu.pipeline_mode<synchronous>, transform_indices = @transform_1, window_bounds = array<i64: 1, 4, 1>}, {pipeline_mode = #tpu.pipeline_mode<synchronous>, transform_indices = @transform_2, window_bounds = array<i64: 1, 4, 1>}, {transform_indices = @transform_3, window_bounds = array<i64: 1, 128>}, {transform_indices = @transform_4, window_bounds = array<i64: 1, 4, 128>}]} {
    %c0_i32 = arith.constant 0 : i32
    %0 = arith.cmpi eq, %arg1, %c0_i32 : i32
    %1 = arith.extui %0 : i1 to i32
    %c0_i32_0 = arith.constant 0 : i32
    %2 = arith.cmpi ne, %1, %c0_i32_0 : i32
    scf.if %2 {
      %cst_38 = arith.constant 0.000000e+00 : f32
      %100 = vector.broadcast %cst_38 : f32 to vector<1x1x1xf32>
      %c0_39 = arith.constant 0 : index
      %c0_40 = arith.constant 0 : index
      %c0_41 = arith.constant 0 : index
      %101 = vector.load %arg7[%c0_39, %c0_40, %c0_41] : memref<1x1x1xf32, #tpu.memory_space<vmem>>, vector<1x1x1xf32>
      tpu.vector_store %arg7[%c0_39, %c0_40, %c0_41], %100 {strides = array<i32>} : memref<1x1x1xf32, #tpu.memory_space<vmem>>, vector<1x1x1xf32>,
      %cst_42 = arith.constant 0.000000e+00 : f32
      %102 = vector.broadcast %cst_42 : f32 to vector<1x1x1xf32>
      %c0_43 = arith.constant 0 : index
      %c0_44 = arith.constant 0 : index
      %c0_45 = arith.constant 0 : index
      %103 = vector.load %arg8[%c0_43, %c0_44, %c0_45] : memref<1x1x1xf32, #tpu.memory_space<vmem>>, vector<1x1x1xf32>
      tpu.vector_store %arg8[%c0_43, %c0_44, %c0_45], %102 {strides = array<i32>} : memref<1x1x1xf32, #tpu.memory_space<vmem>>, vector<1x1x1xf32>,
    } else {
    }
    %c0 = arith.constant 0 : index
    %c0_1 = arith.constant 0 : index
    %c0_2 = arith.constant 0 : index
    %3 = vector.load %arg3[%c0, %c0_1, %c0_2] : memref<1x4x1xf32, #tpu.memory_space<vmem>>, vector<1x4x1xf32>
    %4 = vector.shape_cast %3 : vector<1x4x1xf32> to vector<4x1xf32>
    %c0_3 = arith.constant 0 : index
    %c0_4 = arith.constant 0 : index
    %c0_5 = arith.constant 0 : index
    %5 = vector.load %arg4[%c0_3, %c0_4, %c0_5] : memref<1x4x1xf32, #tpu.memory_space<vmem>>, vector<1x4x1xf32>
    %6 = vector.shape_cast %5 : vector<1x4x1xf32> to vector<4x1xf32>
    %c0_6 = arith.constant 0 : index
    %c0_7 = arith.constant 0 : index
    %7 = vector.load %arg5[%c0_6, %c0_7] : memref<1x128xf32, #tpu.memory_space<vmem>>, vector<1x128xf32>
    %8 = tpu.iota {dimensions = array<i32: 1>} : vector<1x256xi32>
    %c128_i32 = arith.constant 128 : i32
    %9 = vector.broadcast %c128_i32 : i32 to vector<1x256xi32>
    %10 = arith.cmpi sge, %8, %9 : vector<1x256xi32>
    %c128_i32_8 = arith.constant 128 : i32
    %11 = vector.broadcast %c128_i32_8 : i32 to vector<1x256xi32>
    %12 = arith.subi %8, %11 : vector<1x256xi32>
    %13 = arith.select %10, %12, %8 : vector<1x256xi1>, vector<1x256xi32>
    %c0_9 = arith.constant 0 : index
    %c0_10 = arith.constant 0 : index
    %c0_11 = arith.constant 0 : index
    %14 = vector.load %arg2[%c0_9, %c0_10, %c0_11] : memref<1x4x128xf32, #tpu.memory_space<vmem>>, vector<1x4x128xf32>
    %15 = vector.shape_cast %14 : vector<1x4x128xf32> to vector<4x128xf32>
    %cst = arith.constant dense<0.000000e+00> : vector<128xf32>
    %16 = vector.multi_reduction <add>, %15, %cst [0] : vector<4x128xf32> to vector<128xf32>
    %17 = vector.shape_cast %16 : vector<128xf32> to vector<1x128xf32>
    %18 = arith.mulf %15, %15 : vector<4x128xf32>
    %cst_12 = arith.constant dense<0.000000e+00> : vector<128xf32>
    %19 = vector.multi_reduction <add>, %18, %cst_12 [0] : vector<4x128xf32> to vector<128xf32>
    %20 = vector.shape_cast %19 : vector<128xf32> to vector<1x128xf32>
    %21 = tpu.concatenate %17, %20 in 1 : vector<1x128xf32>, vector<1x128xf32> -> vector<1x256xf32>
    %c1_i32 = arith.constant 1 : i32
    %22 = tpu.dynamic_rotate %21 by %c1_i32 dim 1 : vector<1x256xf32>, i32 -> vector<1x256xf32>
    %c1_i32_13 = arith.constant 1 : i32
    %23 = vector.broadcast %c1_i32_13 : i32 to vector<1x256xi32>
    %24 = arith.cmpi sge, %13, %23 : vector<1x256xi32>
    %25 = arith.addf %21, %22 : vector<1x256xf32>
    %26 = arith.select %24, %25, %21 : vector<1x256xi1>, vector<1x256xf32>
    %c2_i32 = arith.constant 2 : i32
    %27 = tpu.dynamic_rotate %26 by %c2_i32 dim 1 : vector<1x256xf32>, i32 -> vector<1x256xf32>
    %c2_i32_14 = arith.constant 2 : i32
    %28 = vector.broadcast %c2_i32_14 : i32 to vector<1x256xi32>
    %29 = arith.cmpi sge, %13, %28 : vector<1x256xi32>
    %30 = arith.addf %26, %27 : vector<1x256xf32>
    %31 = arith.select %29, %30, %26 : vector<1x256xi1>, vector<1x256xf32>
    %c4_i32 = arith.constant 4 : i32
    %32 = tpu.dynamic_rotate %31 by %c4_i32 dim 1 : vector<1x256xf32>, i32 -> vector<1x256xf32>
    %c4_i32_15 = arith.constant 4 : i32
    %33 = vector.broadcast %c4_i32_15 : i32 to vector<1x256xi32>
    %34 = arith.cmpi sge, %13, %33 : vector<1x256xi32>
    %35 = arith.addf %31, %32 : vector<1x256xf32>
    %36 = arith.select %34, %35, %31 : vector<1x256xi1>, vector<1x256xf32>
    %c8_i32 = arith.constant 8 : i32
    %37 = tpu.dynamic_rotate %36 by %c8_i32 dim 1 : vector<1x256xf32>, i32 -> vector<1x256xf32>
    %c8_i32_16 = arith.constant 8 : i32
    %38 = vector.broadcast %c8_i32_16 : i32 to vector<1x256xi32>
    %39 = arith.cmpi sge, %13, %38 : vector<1x256xi32>
    %40 = arith.addf %36, %37 : vector<1x256xf32>
    %41 = arith.select %39, %40, %36 : vector<1x256xi1>, vector<1x256xf32>
    %c16_i32 = arith.constant 16 : i32
    %42 = tpu.dynamic_rotate %41 by %c16_i32 dim 1 : vector<1x256xf32>, i32 -> vector<1x256xf32>
    %c16_i32_17 = arith.constant 16 : i32
    %43 = vector.broadcast %c16_i32_17 : i32 to vector<1x256xi32>
    %44 = arith.cmpi sge, %13, %43 : vector<1x256xi32>
    %45 = arith.addf %41, %42 : vector<1x256xf32>
    %46 = arith.select %44, %45, %41 : vector<1x256xi1>, vector<1x256xf32>
    %c32_i32 = arith.constant 32 : i32
    %47 = tpu.dynamic_rotate %46 by %c32_i32 dim 1 : vector<1x256xf32>, i32 -> vector<1x256xf32>
    %c32_i32_18 = arith.constant 32 : i32
    %48 = vector.broadcast %c32_i32_18 : i32 to vector<1x256xi32>
    %49 = arith.cmpi sge, %13, %48 : vector<1x256xi32>
    %50 = arith.addf %46, %47 : vector<1x256xf32>
    %51 = arith.select %49, %50, %46 : vector<1x256xi1>, vector<1x256xf32>
    %c64_i32 = arith.constant 64 : i32
    %52 = tpu.dynamic_rotate %51 by %c64_i32 dim 1 : vector<1x256xf32>, i32 -> vector<1x256xf32>
    %c64_i32_19 = arith.constant 64 : i32
    %53 = vector.broadcast %c64_i32_19 : i32 to vector<1x256xi32>
    %54 = arith.cmpi sge, %13, %53 : vector<1x256xi32>
    %55 = arith.addf %51, %52 : vector<1x256xf32>
    %56 = arith.select %54, %55, %51 : vector<1x256xi1>, vector<1x256xf32>
    %57 = vector.extract_strided_slice %56 {offsets = [0, 0], sizes = [1, 128], strides = [1, 1]} : vector<1x256xf32> to vector<1x128xf32>
    %c0_20 = arith.constant 0 : index
    %c0_21 = arith.constant 0 : index
    %c0_22 = arith.constant 0 : index
    %58 = vector.load %arg7[%c0_20, %c0_21, %c0_22] : memref<1x1x1xf32, #tpu.memory_space<vmem>>, vector<1x1x1xf32>
    %59 = vector.shape_cast %58 : vector<1x1x1xf32> to vector<1x1xf32>
    %60 = vector.broadcast %59 : vector<1x1xf32> to vector<1x128xf32>
    %61 = arith.addf %57, %60 : vector<1x128xf32>
    %62 = vector.extract_strided_slice %56 {offsets = [0, 128], sizes = [1, 128], strides = [1, 1]} : vector<1x256xf32> to vector<1x128xf32>
    %c0_23 = arith.constant 0 : index
    %c0_24 = arith.constant 0 : index
    %c0_25 = arith.constant 0 : index
    %63 = vector.load %arg8[%c0_23, %c0_24, %c0_25] : memref<1x1x1xf32, #tpu.memory_space<vmem>>, vector<1x1x1xf32>
    %64 = vector.shape_cast %63 : vector<1x1x1xf32> to vector<1x1xf32>
    %65 = vector.broadcast %64 : vector<1x1xf32> to vector<1x128xf32>
    %66 = arith.addf %62, %65 : vector<1x128xf32>
    %67 = vector.extract_strided_slice %61 {offsets = [0, 127], sizes = [1, 1], strides = [1, 1]} : vector<1x128xf32> to vector<1x1xf32>
    %c0_26 = arith.constant 0 : index
    %c0_27 = arith.constant 0 : index
    %c0_28 = arith.constant 0 : index
    %68 = vector.load %arg7[%c0_26, %c0_27, %c0_28] : memref<1x1x1xf32, #tpu.memory_space<vmem>>, vector<1x1x1xf32>
    %69 = vector.shape_cast %68 : vector<1x1x1xf32> to vector<1x1xf32>
    %70 = vector.shape_cast %67 : vector<1x1xf32> to vector<1x1x1xf32>
    tpu.vector_store %arg7[%c0_26, %c0_27, %c0_28], %70 {strides = array<i32>} : memref<1x1x1xf32, #tpu.memory_space<vmem>>, vector<1x1x1xf32>,
    %71 = vector.extract_strided_slice %66 {offsets = [0, 127], sizes = [1, 1], strides = [1, 1]} : vector<1x128xf32> to vector<1x1xf32>
    %c0_29 = arith.constant 0 : index
    %c0_30 = arith.constant 0 : index
    %c0_31 = arith.constant 0 : index
    %72 = vector.load %arg8[%c0_29, %c0_30, %c0_31] : memref<1x1x1xf32, #tpu.memory_space<vmem>>, vector<1x1x1xf32>
    %73 = vector.shape_cast %72 : vector<1x1x1xf32> to vector<1x1xf32>
    %74 = vector.shape_cast %71 : vector<1x1xf32> to vector<1x1x1xf32>
    tpu.vector_store %arg8[%c0_29, %c0_30, %c0_31], %74 {strides = array<i32>} : memref<1x1x1xf32, #tpu.memory_space<vmem>>, vector<1x1x1xf32>,
    %75 = arith.mulf %61, %7 : vector<1x128xf32>
    %76 = arith.mulf %66, %7 : vector<1x128xf32>
    %77 = arith.mulf %75, %75 : vector<1x128xf32>
    %78 = arith.subf %76, %77 : vector<1x128xf32>
    %cst_32 = arith.constant 0.000000e+00 : f32
    %79 = vector.broadcast %cst_32 : f32 to vector<1x128xf32>
    %80 = arith.maximumf %78, %79 : vector<1x128xf32>
    %81 = math.sqrt %80 : vector<1x128xf32>
    %cst_33 = arith.constant 9.99999996E-13 : f32
    %82 = vector.broadcast %cst_33 : f32 to vector<1x128xf32>
    %83 = arith.addf %81, %82 : vector<1x128xf32>
    %84 = tpu.reciprocal %83 {approx = true} : vector<1x128xf32> -> vector<1x128xf32>
    %85 = arith.mulf %83, %84 : vector<1x128xf32>
    %cst_34 = arith.constant 2.000000e+00 : f32
    %86 = vector.broadcast %cst_34 : f32 to vector<1x128xf32>
    %87 = arith.subf %86, %85 : vector<1x128xf32>
    %88 = arith.mulf %84, %87 : vector<1x128xf32>
    %89 = vector.broadcast %75 : vector<1x128xf32> to vector<4x128xf32>
    %90 = arith.subf %15, %89 : vector<4x128xf32>
    %91 = vector.broadcast %88 : vector<1x128xf32> to vector<4x128xf32>
    %92 = arith.mulf %90, %91 : vector<4x128xf32>
    %93 = vector.broadcast %4 : vector<4x1xf32> to vector<4x128xf32>
    %94 = arith.mulf %92, %93 : vector<4x128xf32>
    %95 = vector.broadcast %6 : vector<4x1xf32> to vector<4x128xf32>
    %96 = arith.addf %94, %95 : vector<4x128xf32>
    %c0_35 = arith.constant 0 : index
    %c0_36 = arith.constant 0 : index
    %c0_37 = arith.constant 0 : index
    %97 = vector.load %arg6[%c0_35, %c0_36, %c0_37] : memref<1x4x128xf32, #tpu.memory_space<vmem>>, vector<1x4x128xf32>
    %98 = vector.shape_cast %97 : vector<1x4x128xf32> to vector<4x128xf32>
    %99 = vector.shape_cast %96 : vector<4x128xf32> to vector<1x4x128xf32>
    tpu.vector_store %arg6[%c0_35, %c0_36, %c0_37], %99 {strides = array<i32>} : memref<1x4x128xf32, #tpu.memory_space<vmem>>, vector<1x4x128xf32>,
    return
  }
  func.func @transform_0(%arg0: i32, %arg1: i32) -> (i32, i32, i32) {
    %c0_i32 = arith.constant 0 : i32
    %c0_i32_0 = arith.constant 0 : i32
    return %arg0, %c0_i32, %arg1 : i32, i32, i32
  }
  func.func @transform_1(%arg0: i32, %arg1: i32) -> (i32, i32, i32) {
    %c0_i32 = arith.constant 0 : i32
    %c0_i32_0 = arith.constant 0 : i32
    %c0_i32_1 = arith.constant 0 : i32
    %c0_i32_2 = arith.constant 0 : i32
    return %c0_i32, %c0_i32_0, %c0_i32_1 : i32, i32, i32
  }
  func.func @transform_2(%arg0: i32, %arg1: i32) -> (i32, i32, i32) {
    %c0_i32 = arith.constant 0 : i32
    %c0_i32_0 = arith.constant 0 : i32
    %c0_i32_1 = arith.constant 0 : i32
    %c0_i32_2 = arith.constant 0 : i32
    return %c0_i32, %c0_i32_0, %c0_i32_1 : i32, i32, i32
  }
  func.func @transform_3(%arg0: i32, %arg1: i32) -> (i32, i32) {
    %c0_i32 = arith.constant 0 : i32
    %c0_i32_0 = arith.constant 0 : i32
    return %c0_i32, %arg1 : i32, i32
  }
  func.func @transform_4(%arg0: i32, %arg1: i32) -> (i32, i32, i32) {
    %c0_i32 = arith.constant 0 : i32
    %c0_i32_0 = arith.constant 0 : i32
    return %arg0, %c0_i32, %arg1 : i32, i32, i32
  }
}

</mosaic_0001>

<llo_original>
// kernel: tpu_custom_call.1
$region0: #{tpu_custom_call.1}
  #allocation0 [shape = 'u32[]', space=smem, size = 0x4, offset = 0x4, fixed_abs, tag = 'smem constant byte address 0x4 - core index']
  #allocation1 [shape = 'u32[72,128]{1,0:T(1,128)}', space=vmem, size = 0x9000, scoped, tag = 'internal scratch']
  #allocation2 [shape = 'f32[1,1,1]{2,1,0:T(1,128)}', space=vmem, size = 0x200, scoped, tag = 'scratch operand']
  #allocation3 [shape = 'f32[1,1,1]{2,1,0:T(1,128)}', space=vmem, size = 0x200, scoped, tag = 'scratch operand']
  %s0 = inlined_call_operand.hbm [shape: f32[2,4,256], index: 0, kind: input, shape index: {}]
  %s1 = inlined_call_operand.vmem [shape: f32[1,4,1], index: 1, kind: input, shape index: {}]
  %s2 = inlined_call_operand.vmem [shape: f32[1,4,1], index: 2, kind: input, shape index: {}]
  %s3 = inlined_call_operand.vmem [shape: f32[1,256], index: 3, kind: input, shape index: {}]
  %s4 = inlined_call_operand.hbm [shape: f32[2,4,256], index: 4, kind: output, shape index: {}]
  %s5 = sld [smem:[#allocation0]]
  $region57: #{tpu_custom_call.1} parent=0
    _
  %s7 = ssub.s32 1, %s5
  %s8 = scalar_select 0, %s7, %s5
  $region1: #{tpu_custom_call.1} parent=0
    #allocation4 [shape = 'u8[4096]{0}', space=vmem, size = 0x1000, scoped, tag = 'input window, operand 0']
    #allocation5 [shape = 's32[2]{0}', space=sflag, size = 0x8, scoped, tag = 'scoped memory for tpu_custom_call.1']
    #allocation6 [shape = 's32[2]{0}', space=sflag, size = 0x8, scoped, tag = 'scoped memory for tpu_custom_call.1']
    #allocation7 [shape = 'u8[4096]{0}', space=vmem, size = 0x1000, scoped, tag = 'output window, operand 0']
    %9 = vsyncpa [#allocation5], 0
    %s10 = scalar_lea.sflag [#allocation5], 1
    %11 = vsyncpa %s10, 0
    %12 = vsyncpa [#allocation6], 0
    %s13 = scalar_lea.sflag [#allocation6], 1
    %14 = vsyncpa %s13, 0
    loop: start=0, step=1, limit=6
    $region2: #{tpu_custom_call.1} parent=1 // loop_pre_header
      _
    $region3: #{tpu_custom_call.1} parent=1 // loop_header
      %s16 = sphi 0, %s20
      %p17 = scmp.ge.s32.totalorder %s16, 6
      %s23 = sphi 0, %s35
      %s24 = sphi 0, %s31
      %s25 = sphi 0, %s23
      %s26 = sphi 0, %s24
      %s27 = sphi 0, %s25
      %s28 = sphi 0, %s26
      %s40 = sphi 0, %s42
      %s43 = sphi 0, %s40
      %s44 = sphi 0, %s43
      %s60 = sphi 0, %s44
      %s64 = sphi 0, %s64
      %s66 = sphi 0, %s64
      %s67 = sphi 0, %s66
      %s81 = sphi 0, %s67
      %s85 = sphi 0, %s85
      %s87 = sphi 0, %s85
      %s88 = sphi 0, %s87
      %s102 = sphi 0, %s88
      %s108 = sphi 0, %s110
      %s111 = sphi 0, %s108
      %s112 = sphi 0, %s111
      %s128 = sphi 0, %s112
      %s136 = sphi 0, %s138
      %s139 = sphi 0, %s136
      %s140 = sphi 0, %s139
      %s156 = sphi 0, %s140
    $region4: #{tpu_custom_call.1} parent=1 // loop_header_branch
      %19 = sbr.rel (%p17) target = $region8
    $region5: #{tpu_custom_call.1} parent=1 // loop_body
      %s21 = ssub.s32 %s16, 1
      %s22 = ssub.s32 %s16, 2
      %s29 = sadd.s32 1, %s24
      %p30 = scmp.ge.s32.totalorder %s29, 2
      %s31 = scalar_select %p30, 0, %s29
      %s32 = sadd.s32 1, %s23
      %s33 = scalar_select %p30, %s32, %s23
      %p34 = scmp.ge.s32.totalorder %s33, 2
      %s35 = scalar_select %p34, 0, %s33
      %s36 = ssub.s32 %s23, %s35
      %s37 = ssub.s32 %s24, %s31
      %s38 = sor.u32 %s36, %s37
      %p39 = scmp.eq.s32.totalorder %s38, 0
      %s41 = sadd.s32 %s40, 1
      %s42 = scalar_select %p39, %s40, %s41
      %p45 = pneg %p39
      %p46 = scmp.eq.s32.totalorder %s16, 3
      %p47 = por %p45, %p46
      %p48 = scmp.ne.s32.totalorder %s40, %s43
      %p49 = scmp.eq.s32.totalorder %s16, 0
      %p50 = por %p48, %p49
      %p51 = scmp.ne.s32.totalorder %s40, %s43
      %p52 = scmp.eq.s32.totalorder %s21, 3
      %p53 = por %p51, %p52
      %p54 = scmp.ne.s32.totalorder %s43, %s44
      %p55 = scmp.eq.s32.totalorder %s21, 0
      %p56 = por %p54, %p55
      %p57 = scmp.ne.s32.totalorder %s43, %s44
      %p58 = scmp.eq.s32.totalorder %s22, 3
      %p59 = por %p57, %p58
      %p61 = scmp.ne.s32.totalorder %s44, %s60
      %p62 = scmp.eq.s32.totalorder %s22, 0
      %p63 = por %p61, %p62
      %s65 = sadd.s32 %s64, 1
      %p68 = scmp.eq.s32.totalorder %s16, 3
      %p69 = scmp.ne.s32.totalorder %s64, %s66
      %p70 = scmp.eq.s32.totalorder %s16, 0
      %p71 = por %p69, %p70
      %p72 = scmp.ne.s32.totalorder %s64, %s66
      %p73 = scmp.eq.s32.totalorder %s21, 3
      %p74 = por %p72, %p73
      %p75 = scmp.ne.s32.totalorder %s66, %s67
      %p76 = scmp.eq.s32.totalorder %s21, 0
      %p77 = por %p75, %p76
      %p78 = scmp.ne.s32.totalorder %s66, %s67
      %p79 = scmp.eq.s32.totalorder %s22, 3
      %p80 = por %p78, %p79
      %p82 = scmp.ne.s32.totalorder %s67, %s81
      %p83 = scmp.eq.s32.totalorder %s22, 0
      %p84 = por %p82, %p83
      %s86 = sadd.s32 %s85, 1
      %p89 = scmp.eq.s32.totalorder %s16, 3
      %p90 = scmp.ne.s32.totalorder %s85, %s87
      %p91 = scmp.eq.s32.totalorder %s16, 0
      %p92 = por %p90, %p91
      %p93 = scmp.ne.s32.totalorder %s85, %s87
      %p94 = scmp.eq.s32.totalorder %s21, 3
      %p95 = por %p93, %p94
      %p96 = scmp.ne.s32.totalorder %s87, %s88
      %p97 = scmp.eq.s32.totalorder %s21, 0
      %p98 = por %p96, %p97
      %p99 = scmp.ne.s32.totalorder %s87, %s88
      %p100 = scmp.eq.s32.totalorder %s22, 3
      %p101 = por %p99, %p100
      %p103 = scmp.ne.s32.totalorder %s88, %s102
      %p104 = scmp.eq.s32.totalorder %s22, 0
      %p105 = por %p103, %p104
      %s106 = ssub.s32 %s24, %s31
      %p107 = scmp.eq.s32.totalorder %s106, 0
      %s109 = sadd.s32 %s108, 1
      %s110 = scalar_select %p107, %s108, %s109
      %p113 = pneg %p107
      %p114 = scmp.eq.s32.totalorder %s16, 3
      %p115 = por %p113, %p114
      %p116 = scmp.ne.s32.totalorder %s108, %s111
      %p117 = scmp.eq.s32.totalorder %s16, 0
      %p118 = por %p116, %p117
      %p119 = scmp.ne.s32.totalorder %s108, %s111
      %p120 = scmp.eq.s32.totalorder %s21, 3
      %p121 = por %p119, %p120
      %p122 = scmp.ne.s32.totalorder %s111, %s112
      %p123 = scmp.eq.s32.totalorder %s21, 0
      %p124 = por %p122, %p123
      %p125 = scmp.ne.s32.totalorder %s111, %s112
      %p126 = scmp.eq.s32.totalorder %s22, 3
      %p127 = por %p125, %p126
      %p129 = scmp.ne.s32.totalorder %s112, %s128
      %p130 = scmp.eq.s32.totalorder %s22, 0
      %p131 = por %p129, %p130
      %s132 = ssub.s32 %s23, %s35
      %s133 = ssub.s32 %s24, %s31
      %s134 = sor.u32 %s132, %s133
      %p135 = scmp.eq.s32.totalorder %s134, 0
      %s137 = sadd.s32 %s136, 1
      %s138 = scalar_select %p135, %s136, %s137
      %p141 = pneg %p135
      %p142 = scmp.eq.s32.totalorder %s16, 3
      %p143 = por %p141, %p142
      %p144 = scmp.ne.s32.totalorder %s136, %s139
      %p145 = scmp.eq.s32.totalorder %s16, 0
      %p146 = por %p144, %p145
      %p147 = scmp.ne.s32.totalorder %s136, %s139
      %p148 = scmp.eq.s32.totalorder %s21, 3
      %p149 = por %p147, %p148
      %p150 = scmp.ne.s32.totalorder %s139, %s140
      %p151 = scmp.eq.s32.totalorder %s21, 0
      %p152 = por %p150, %p151
      %p153 = scmp.ne.s32.totalorder %s139, %s140
      %p154 = scmp.eq.s32.totalorder %s22, 3
      %p155 = por %p153, %p154
      %p157 = scmp.ne.s32.totalorder %s140, %s156
      %p158 = scmp.eq.s32.totalorder %s22, 0
      %p159 = por %p157, %p158
      %p160 = scmp.le.s32.totalorder 1, %s16
      %p161 = scmp.lt.s32.totalorder %s16, 5
      %p162 = pnand %p160, %p161
      %p163 = pneg %p162
      // Predicated region
      $region9: #{tpu_custom_call.1} parent=5 // pred_check
        _
      $region10: #{tpu_custom_call.1} parent=5 // pred_check_branch
        %165 = sbr.rel (%p162) target = $region12
      $region11: #{tpu_custom_call.1} parent=5 // pred_region
        %s166 = ssub.s32 %s16, 1
        // Predicated region
        $region13: #{tpu_custom_call.1} parent=11 // pred_check
          %p167 = pneg %p77
        $region14: #{tpu_custom_call.1} parent=11 // pred_check_branch
          %169 = sbr.rel (%p167) target = $region16
        $region15: #{tpu_custom_call.1} parent=11 // pred_region
          _
        $region16: #{tpu_custom_call.1} parent=11 // pred_fallthru
          _
        // Predicated region
        $region17: #{tpu_custom_call.1} parent=11 // pred_check
          %p170 = pneg %p98
        $region18: #{tpu_custom_call.1} parent=11 // pred_check_branch
          %172 = sbr.rel (%p170) target = $region20
        $region19: #{tpu_custom_call.1} parent=11 // pred_region
          _
        $region20: #{tpu_custom_call.1} parent=11 // pred_fallthru
          _
      $region12: #{tpu_custom_call.1} parent=5 // pred_fallthru
        _
      %p173 = scmp.lt.s32.totalorder %s16, 4
      // Predicated region
      $region21: #{tpu_custom_call.1} parent=5 // pred_check
        %p174 = pneg %p173
      $region22: #{tpu_custom_call.1} parent=5 // pred_check_branch
        %176 = sbr.rel (%p174) target = $region24
      $region23: #{tpu_custom_call.1} parent=5 // pred_region
        // Predicated region
        $region25: #{tpu_custom_call.1} parent=23 // pred_check
          %p177 = pneg %p50
        $region26: #{tpu_custom_call.1} parent=23 // pred_check_branch
          %179 = sbr.rel (%p177) target = $region28
        $region27: #{tpu_custom_call.1} parent=23 // pred_region
          %s180 = sand.u32 %s40, 1
          %s181 = scalar_lea.sflag [#allocation5], %s180
          %s182 = sand.u32 %s40, 1
          %s183 = smul.addr %s182, 4
          %s184 = scalar_lea.vmem [#allocation4], %s183
          %186 = vsyncadd %s181, 0
          %s187 = smul.addr %s23, 2
          %s188 = sadd.s32 %s24, %s187
          %s189 = smul.addr %s188, 4
          %s190 = scalar_lea.hbm %s0, %s189
          %s192 = sshll.u32 %s190, 4
          %s193 = int_to_ptr.hbm [resolvable:$true] %s192
          %s194 = sshll.u32 %s184, 4
          %s195 = int_to_ptr.vmem [resolvable:$true] %s194
          %197 = dma.hbm_to_vmem [thread:$0]  %s193, 64, %s195, %s181
        $region28: #{tpu_custom_call.1} parent=23 // pred_fallthru
          _
        // Predicated region
        $region29: #{tpu_custom_call.1} parent=23 // pred_check
          %p198 = pneg %p118
        $region30: #{tpu_custom_call.1} parent=23 // pred_check_branch
          %200 = sbr.rel (%p198) target = $region32
        $region31: #{tpu_custom_call.1} parent=23 // pred_region
          %p201 = scmp.lt.s32.totalorder %s24, 1
          %s202 = scalar_select %p201, %s24, 1
          %s203 = scalar_lea.vmem %s3, %s202
        $region32: #{tpu_custom_call.1} parent=23 // pred_fallthru
          _
      $region24: #{tpu_custom_call.1} parent=5 // pred_fallthru
        _
      %p204 = scmp.le.s32.totalorder 1, %s16
      %p205 = scmp.lt.s32.totalorder %s16, 5
      %p206 = pnand %p204, %p205
      %p207 = pneg %p206
      // Predicated region
      $region33: #{tpu_custom_call.1} parent=5 // pred_check
        _
      $region34: #{tpu_custom_call.1} parent=5 // pred_check_branch
        %209 = sbr.rel (%p206) target = $region36
      $region35: #{tpu_custom_call.1} parent=5 // pred_region
        %s210 = ssub.s32 %s16, 1
        %s211 = sand.u32 %s43, 1
        %s212 = scalar_lea.sflag [#allocation5], %s211
        %s213 = sand.u32 %s43, 1
        %s214 = smul.addr %s213, 4
        %s215 = scalar_lea.vmem [#allocation4], %s214
        // Predicated region
        $region37: #{tpu_custom_call.1} parent=35 // pred_check
          %p216 = pneg %p56
        $region38: #{tpu_custom_call.1} parent=35 // pred_check_branch
          %218 = sbr.rel (%p216) target = $region40
        $region39: #{tpu_custom_call.1} parent=35 // pred_region
          %220 = dma.done %s212, 64
        $region40: #{tpu_custom_call.1} parent=35 // pred_fallthru
          _
        %s221 = sand.u32 %s43, 1
        %s222 = scalar_lea.sflag [#allocation5], %s221
        %s223 = sand.u32 %s43, 1
        %s224 = smul.addr %s223, 4
        %s225 = scalar_lea.vmem [#allocation4], %s224
        %p226 = pneg %p56
        %p227 = pneg %p53
        %p228 = pneg %p77
        %p229 = pneg %p74
        %p230 = pneg %p98
        %p231 = pneg %p95
        %p232 = scmp.lt.s32.totalorder %s26, 1
        %s233 = scalar_select %p232, %s26, 1
        %s234 = scalar_lea.vmem %s3, %s233
        %p235 = pneg %p124
        %p236 = pneg %p121
        %p237 = pneg %p152
        %p238 = pneg %p149
        %s239 = sand.u32 %s139, 1
        %s240 = scalar_lea.sflag [#allocation6], %s239
        %s241 = sand.u32 %s139, 1
        %s242 = smul.addr %s241, 4
        %s243 = scalar_lea.vmem [#allocation7], %s242
        %p244 = scmp.lt.s32.totalorder %s26, 1
        %s245 = scalar_select %p244, %s26, 1
        %s246 = scalar_lea.vmem %s3, %s245
        %p247 = scmp.eq.s32.totalorder %s26, 0
        // Predicated region
        $region41: #{tpu_custom_call.1} parent=35 // pred_check
          %p248 = pneg %p247
        $region42: #{tpu_custom_call.1} parent=35 // pred_check_branch
          %250 = sbr.rel (%p248) target = $region44
        $region43: #{tpu_custom_call.1} parent=35 // pred_region
          %vm251 = vcmask 0
          %252 = vst.msk [vmem:[#allocation2] sm:$0x1] %vm251, 0.0
          %253 = vst.msk [vmem:[#allocation3] sm:$0x1] %vm251, 0.0
        $region44: #{tpu_custom_call.1} parent=35 // pred_fallthru
          _
        %v254 = vld [vmem:[%s1] sm:$0xf]
        %v255 = vld [vmem:[%s2] sm:$0xf]
        %v256 = vld [vmem:[%s246] sm:$0x1]
        %v257 = vlaneseq
        %v258 = vand.u32 %v257, 127
        %v259 = vadd.s32 %v258, 128
        %vm260 = vcmp.ge.s32.totalorder %v258, 128
        %vm261 = vcmp.ge.s32.totalorder %v259, 128
        %v262 = vsub.s32 %v258, 128
        %v263 = vsel %vm260, %v262, %v258
        %v264 = vsel %vm261, %v258, %v259
        %v265 = vld [vmem:[%s215] sm:$0xf]
        %vm266 = vcmask 1043456
        %v267 = vsel %vm266, %v265, 0.0
        %v268 = vrot.slane %v267, 4
        %v269 = vadd.f32 %v267, %v268
        %v270 = vrot.slane %v269, 2
        %v271 = vadd.f32 %v269, %v270
        %v272 = vrot.slane %v271, 1
        %v273 = vadd.f32 %v271, %v272
        %v274 = vmul.f32 %v265, %v265
        %v275 = vsel %vm266, %v274, 0.0
        %v276 = vrot.slane %v275, 4
        %v277 = vadd.f32 %v275, %v276
        %v278 = vrot.slane %v277, 2
        %v279 = vadd.f32 %v277, %v278
        %v280 = vrot.slane %v279, 1
        %v281 = vadd.f32 %v279, %v280
        %282 = vrot.lane.b32.xlu0 %v273, 1
        %v283 = vpop.permute.xlu0 %282
        %284 = vrot.lane.b32.xlu0 %v281, 1
        %v285 = vpop.permute.xlu0 %284
        %vm286 = vcmp.lt.s32.totalorder %v258, 1
        %v287 = vsel %vm286, %v283, %v285
        %v288 = vsel %vm286, %v285, %v283
        %vm289 = vcmp.ge.s32.totalorder %v263, 1
        %vm290 = vcmp.ge.s32.totalorder %v264, 1
        %v291 = vadd.f32 %v273, %v288
        %v292 = vadd.f32 %v281, %v287
        %v293 = vsel %vm289, %v291, %v273
        %v294 = vsel %vm290, %v292, %v281
        %295 = vrot.lane.b32.xlu0 %v293, 2
        %v296 = vpop.permute.xlu0 %295
        %297 = vrot.lane.b32.xlu0 %v294, 2
        %v298 = vpop.permute.xlu0 %297
        %vm299 = vcmp.lt.s32.totalorder %v258, 2
        %v300 = vsel %vm299, %v296, %v298
        %v301 = vsel %vm299, %v298, %v296
        %vm302 = vcmp.ge.s32.totalorder %v263, 2
        %vm303 = vcmp.ge.s32.totalorder %v264, 2
        %v304 = vadd.f32 %v293, %v301
        %v305 = vadd.f32 %v294, %v300
        %v306 = vsel %vm302, %v304, %v293
        %v307 = vsel %vm303, %v305, %v294
        %308 = vrot.lane.b32.xlu0 %v306, 4
        %v309 = vpop.permute.xlu0 %308
        %310 = vrot.lane.b32.xlu0 %v307, 4
        %v311 = vpop.permute.xlu0 %310
        %vm312 = vcmp.lt.s32.totalorder %v258, 4
        %v313 = vsel %vm312, %v309, %v311
        %v314 = vsel %vm312, %v311, %v309
        %vm315 = vcmp.ge.s32.totalorder %v263, 4
        %vm316 = vcmp.ge.s32.totalorder %v264, 4
        %v317 = vadd.f32 %v306, %v314
        %v318 = vadd.f32 %v307, %v313
        %v319 = vsel %vm315, %v317, %v306
        %v320 = vsel %vm316, %v318, %v307
        %321 = vrot.lane.b32.xlu0 %v319, 8
        %v322 = vpop.permute.xlu0 %321
        %323 = vrot.lane.b32.xlu0 %v320, 8
        %v324 = vpop.permute.xlu0 %323
        %vm325 = vcmp.lt.s32.totalorder %v258, 8
        %v326 = vsel %vm325, %v322, %v324
        %v327 = vsel %vm325, %v324, %v322
        %vm328 = vcmp.ge.s32.totalorder %v263, 8
        %vm329 = vcmp.ge.s32.totalorder %v264, 8
        %v330 = vadd.f32 %v319, %v327
        %v331 = vadd.f32 %v320, %v326
        %v332 = vsel %vm328, %v330, %v319
        %v333 = vsel %vm329, %v331, %v320
        %334 = vrot.lane.b32.xlu0 %v332, 16
        %v335 = vpop.permute.xlu0 %334
        %336 = vrot.lane.b32.xlu0 %v333, 16
        %v337 = vpop.permute.xlu0 %336
        %vm338 = vcmp.lt.s32.totalorder %v258, 16
        %v339 = vsel %vm338, %v335, %v337
        %v340 = vsel %vm338, %v337, %v335
        %vm341 = vcmp.ge.s32.totalorder %v263, 16
        %vm342 = vcmp.ge.s32.totalorder %v264, 16
        %v343 = vadd.f32 %v332, %v340
        %v344 = vadd.f32 %v333, %v339
        %v345 = vsel %vm341, %v343, %v332
        %v346 = vsel %vm342, %v344, %v333
        %347 = vrot.lane.b32.xlu0 %v345, 32
        %v348 = vpop.permute.xlu0 %347
        %349 = vrot.lane.b32.xlu0 %v346, 32
        %v350 = vpop.permute.xlu0 %349
        %vm351 = vcmp.lt.s32.totalorder %v258, 32
        %v352 = vsel %vm351, %v348, %v350
        %v353 = vsel %vm351, %v350, %v348
        %vm354 = vcmp.ge.s32.totalorder %v263, 32
        %vm355 = vcmp.ge.s32.totalorder %v264, 32
        %v356 = vadd.f32 %v345, %v353
        %v357 = vadd.f32 %v346, %v352
        %v358 = vsel %vm354, %v356, %v345
        %v359 = vsel %vm355, %v357, %v346
        %360 = vrot.lane.b32.xlu0 %v358, 64
        %v361 = vpop.permute.xlu0 %360
        %362 = vrot.lane.b32.xlu0 %v359, 64
        %v363 = vpop.permute.xlu0 %362
        %vm364 = vcmp.lt.s32.totalorder %v258, 64
        %v365 = vsel %vm364, %v361, %v363
        %v366 = vsel %vm364, %v363, %v361
        %vm367 = vcmp.ge.s32.totalorder %v263, 64
        %vm368 = vcmp.ge.s32.totalorder %v264, 64
        %v369 = vadd.f32 %v358, %v366
        %v370 = vadd.f32 %v359, %v365
        %v371 = vsel %vm367, %v369, %v358
        %v372 = vsel %vm368, %v370, %v359
        %v373 = vld [vmem:[#allocation2] sm:$0x1]
        %375 = vset.pattern.permute.xlu0 0
        %376 = vperm.xlu0 %375, %v373
        %v377 = vpop.permute.xlu0 %376
        %v379 = vperm.slane %v377, 0
        %v380 = vadd.f32 %v371, %v379
        %v381 = vld [vmem:[#allocation3] sm:$0x1]
        %383 = vset.pattern.permute.xlu0 0
        %384 = vperm.xlu0 %383, %v381
        %v385 = vpop.permute.xlu0 %384
        %v387 = vperm.slane %v385, 0
        %v388 = vadd.f32 %v372, %v387
        %390 = vrot.lane.b32.xlu0 %v380, 1
        %v391 = vpop.permute.xlu0 %390
        %vm393 = vcmask 0
        %394 = vst.msk [vmem:[#allocation2] sm:$0x1] %vm393, %v391
        %396 = vrot.lane.b32.xlu0 %v388, 1
        %v397 = vpop.permute.xlu0 %396
        %399 = vst.msk [vmem:[#allocation3] sm:$0x1] %vm393, %v397
        %v400 = vmul.f32 %v380, %v256
        %v401 = vmul.f32 %v388, %v256
        %v402 = vmul.f32 %v400, %v400
        %v403 = vsub.f32 %v401, %v402
        %v404 = vmax.f32 %v403, 0.0
        %v405 = vrsqrt.pop %v404
        %v406 = vmul.f32 %v405, %v404
        %v407 = vmul.f32 %v406, %v405
        %v408 = vmul.f32 0.5, %v407
        %v409 = vsub.f32 1.5, %v408
        %v410 = vmul.f32 %v405, %v409
        %v411 = vmul.f32 %v404, %v410
        %vm412 = vcmp.eq.f32.partialorder %v404, inf
        %v413 = vsel %vm412, %v404, %v411
        %vm414 = vcmp.eq.f32.partialorder %v404, 0.0
        %v415 = vand.u32 %v404, 2147483648
        %v416 = vsel %vm414, %v415, %v413
        %v417 = vadd.f32 %v416, 1e-12
        %v418 = vrcp.pop %v417
        %v419 = vmul.f32 %v417, %v418
        %v420 = vsub.f32 2.0, %v419
        %v421 = vmul.f32 %v418, %v420
        %v422 = vperm.slane %v400, 0
        %v423 = vsub.f32 %v265, %v422
        %v424 = vperm.slane %v421, 0
        %v425 = vmul.f32 %v423, %v424
        %427 = vset.pattern.permute.xlu0 0
        %428 = vperm.xlu0 %427, %v254
        %v429 = vpop.permute.xlu0 %428
        %v431 = vmul.f32 %v425, %v429
        %433 = vset.pattern.permute.xlu0 0
        %434 = vperm.xlu0 %433, %v255
        %v435 = vpop.permute.xlu0 %434
        %v437 = vadd.f32 %v431, %v435
        %438 = vst [vmem:[%s243] sm:$0xf] %v437
        %s439 = sand.u32 %s139, 1
        %s440 = scalar_lea.sflag [#allocation6], %s439
        %s441 = sand.u32 %s139, 1
        %s442 = smul.addr %s441, 4
        %s443 = scalar_lea.vmem [#allocation7], %s442
        // Predicated region
        $region45: #{tpu_custom_call.1} parent=35 // pred_check
          %p444 = pneg %p149
        $region46: #{tpu_custom_call.1} parent=35 // pred_check_branch
          %446 = sbr.rel (%p444) target = $region48
        $region47: #{tpu_custom_call.1} parent=35 // pred_region
          %448 = vsyncadd %s440, 0
          %s449 = smul.addr %s25, 2
          %s450 = sadd.s32 %s26, %s449
          %s451 = smul.addr %s450, 4
          %s452 = scalar_lea.hbm %s4, %s451
          %s454 = sshll.u32 %s443, 4
          %s455 = int_to_ptr.vmem [resolvable:$true] %s454
          %s456 = sshll.u32 %s452, 4
          %s457 = int_to_ptr.hbm [resolvable:$true] %s456
          %459 = dma.vmem_to_hbm [thread:$0]  %s455, 64, %s457, %s440
        $region48: #{tpu_custom_call.1} parent=35 // pred_fallthru
          _
      $region36: #{tpu_custom_call.1} parent=5 // pred_fallthru
        _
      %p460 = scmp.le.s32.totalorder 2, %s16
      // Predicated region
      $region49: #{tpu_custom_call.1} parent=5 // pred_check
        %p461 = pneg %p460
      $region50: #{tpu_custom_call.1} parent=5 // pred_check_branch
        %463 = sbr.rel (%p461) target = $region52
      $region51: #{tpu_custom_call.1} parent=5 // pred_region
        %s464 = ssub.s32 %s16, 2
        // Predicated region
        $region53: #{tpu_custom_call.1} parent=51 // pred_check
          %p465 = pneg %p155
        $region54: #{tpu_custom_call.1} parent=51 // pred_check_branch
          %467 = sbr.rel (%p465) target = $region56
        $region55: #{tpu_custom_call.1} parent=51 // pred_region
          %s468 = sand.u32 %s140, 1
          %s469 = scalar_lea.sflag [#allocation6], %s468
          %s470 = sand.u32 %s140, 1
          %s471 = smul.addr %s470, 4
          %s472 = scalar_lea.vmem [#allocation7], %s471
          %474 = dma.done %s469, 64
        $region56: #{tpu_custom_call.1} parent=51 // pred_fallthru
          _
      $region52: #{tpu_custom_call.1} parent=5 // pred_fallthru
        _
    $region6: #{tpu_custom_call.1} parent=1 // loop_footer
      %s20 = sadd.s32 1, %s16
    $region7: #{tpu_custom_call.1} parent=1 // loop_footer_branch
      %15 = sbr.rel target = $region3
    $region8: #{tpu_custom_call.1} parent=1 // loop_exit
      _
    %475 = vsyncpa [#allocation5], 1
    %s476 = scalar_lea.sflag [#allocation5], 1
    %477 = vsyncpa %s476, 1
    %478 = vsyncpa [#allocation6], 1
    %s479 = scalar_lea.sflag [#allocation6], 1
    %480 = vsyncpa %s479, 1

</llo_original>
